<compile_context>
chip_gen: v5e
topology: v5e:2x2
jax: 0.10.0
libtpu: 0.0.40
codegen_flags: <defaults>
</compile_context>

<pallas_src>
import jax
import jax.numpy as jnp
from jax.experimental import pallas as pl
from jax.experimental.pallas import tpu as pltpu


def _round_up(x, m):
    return ((x + m - 1) // m) * m


def _mlp_head_kernel(cls_ref, w1_ref, b1_ref, w2_ref, b2_ref, out_ref):
    """out = relu(cls @ W1 + b1) @ W2 + b2; bf16 MXU operands, f32 accumulation."""
    h = jnp.dot(cls_ref[...], w1_ref[...],
                preferred_element_type=jnp.float32)            # [tb, HDp] f32
    h = jnp.maximum(h + b1_ref[...], 0.0)                      # bias + ReLU (VPU)
    logits = jnp.dot(h.astype(jnp.bfloat16), w2_ref[...],
                     preferred_element_type=jnp.float32)       # [tb, NP] f32
    out_ref[...] = (logits + b2_ref[...]).astype(out_ref.dtype)


def prepare_mlp_head_params(w1, b1, w2, b2):
    """One-time parameter preparation (hoisted out of the per-call wrapper).

    Zero-pads hidden_dim and num_classes up to multiples of 128 so the
    intermediate activation and the logits are lane-dense and the second dot's
    K dim fills the MXU.  The padding is mathematically inert:
    relu(x @ 0 + 0) = 0 and the padded W2 rows/columns are zero.
    Weights are stored bf16 (MXU operands), biases f32.
    """
    H, hidden_dim = w1.shape
    num_classes = w2.shape[1]
    b1 = jnp.asarray(b1).reshape(1, hidden_dim)
    b2 = jnp.asarray(b2).reshape(1, num_classes)

    hdp = _round_up(hidden_dim, 128)
    npad = _round_up(num_classes, 128)
    if hdp != hidden_dim:
        w1 = jnp.pad(w1, ((0, 0), (0, hdp - hidden_dim)))
        b1 = jnp.pad(b1, ((0, 0), (0, hdp - hidden_dim)))
        w2 = jnp.pad(w2, ((0, hdp - hidden_dim), (0, 0)))
    if npad != num_classes:
        w2 = jnp.pad(w2, ((0, 0), (0, npad - num_classes)))
        b2 = jnp.pad(b2, ((0, 0), (0, npad - num_classes)))

    return (w1.astype(jnp.bfloat16), b1.astype(jnp.float32),
            w2.astype(jnp.bfloat16), b2.astype(jnp.float32), num_classes)


def _choose_batch_tile(B, batch_tile):
    if B > batch_tile:
        return batch_tile
    if B > 64:
        # Keep >= 2 grid steps so the "parallel" batch axis can shard across
        # v7x's two TensorCores (no-op on single-core v5e/v6e).
        return _round_up(pl.cdiv(B, 2), 8)
    if B >= 8:
        return (B // 8) * 8        # sublane-aligned -> unmasked f32 stores
    return B                       # tiny batch: block == full batch dim


def mlp_classifier_head(last_hidden_state, params, *, batch_tile=1024,
                        out_dtype=jnp.float32):
    """Fused CLS-extraction + Linear -> ReLU -> Linear head.

    last_hidden_state: [B, S, H] (BERT output layout), ideally bf16.
    params:            output of prepare_mlp_head_params().
    Returns logits [B, num_classes] in out_dtype (bf16 halves store DMA bytes
    if acceptable downstream).
    """
    w1, b1, w2, b2, num_classes = params
    B, S, H = last_hidden_state.shape
    HDp = w1.shape[1]
    NP = w2.shape[1]
    assert w1.shape[0] == H, (w1.shape, H)
    # TODO(synk): generalize to H not a multiple of 128 (would need CLS padding).
    assert H % 128 == 0, "BERT hidden size must be a multiple of 128"
    assert batch_tile % 8 == 0

    # CLS-only input window: view the contiguous [B, S, H] slab as [B, S*H];
    # the column block at index 0 (width H) is exactly the CLS row, so the
    # kernel DMAs only B*H elements from HBM — no wrapper-side slice/pad copy.
    x = last_hidden_state.reshape(B, S * H)

    # Batch tiling: the ragged last block is handled by Pallas boundary
    # masking, so the activation slab is never padded.
    tb = _choose_batch_tile(B, batch_tile)
    nb = pl.cdiv(B, tb)

    itm = lambda a: a.dtype.itemsize
    cost = pl.CostEstimate(
        flops=2 * B * (H * HDp + HDp * NP),
        transcendentals=0,
        bytes_accessed=int(
            B * H * itm(x)
            + w1.size * itm(w1) + b1.size * itm(b1)
            + w2.size * itm(w2) + b2.size * itm(b2)
            + B * NP * jnp.dtype(out_dtype).itemsize),
    )

    out = pl.pallas_call(
        _mlp_head_kernel,
        out_shape=jax.ShapeDtypeStruct((B, NP), out_dtype),
        grid=(nb,),
        in_specs=[
            # Activation stream: one (tb, H) CLS block per grid step.
            pl.BlockSpec((tb, H), lambda i: (i, 0)),
            # Weights / biases: constant block index -> VMEM-resident across
            # grid steps.
            # TODO(synk): at hidden_dim ~3-4k on v7x, single-buffer these
            #             (pipeline_mode=pl.Buffered(1)) to halve resident bytes.
            pl.BlockSpec((H, HDp), lambda i: (0, 0)),
            pl.BlockSpec((1, HDp), lambda i: (0, 0)),
            pl.BlockSpec((HDp, NP), lambda i: (0, 0)),
            pl.BlockSpec((1, NP), lambda i: (0, 0)),
        ],
        out_specs=pl.BlockSpec((tb, NP), lambda i: (i, 0)),
        compiler_params=pltpu.CompilerParams(
            dimension_semantics=("parallel",)),
        cost_estimate=cost,
    )(x, w1, b1, w2, b2)

    return out[:, :num_classes]


def _reference(last_hidden_state, w1, b1, w2, b2):
    """Pure-JAX reference mirroring the kernel's bf16-operand / f32-accum math."""
    cls = last_hidden_state[:, 0, :].astype(jnp.float32)
    h = jnp.maximum(cls @ w1.astype(jnp.float32) + b1.reshape(1, -1), 0.0)
    h = h.astype(jnp.bfloat16).astype(jnp.float32)
    return h @ w2.astype(jnp.float32) + b2.reshape(1, -1)


if __name__ == "__main__":
    # Small, BERT-shaped-but-tiny configuration.
    B = 2            # batch
    S = 8            # sequence length
    H = 128          # "bert hidden_size" (tiny stand-in for 768)
    HIDDEN_DIM = 32  # MLP hidden_dim
    NUM_CLASSES = 8  # num_classes

    key = jax.random.PRNGKey(0)
    k_x, k_w1, k_b1, k_w2, k_b2, k_x2 = jax.random.split(key, 6)

    # Synthetic BERT output (stand-in for bert(...).last_hidden_state), bf16.
    last_hidden_state = jax.random.normal(
        k_x, (B, S, H), dtype=jnp.float32).astype(jnp.bfloat16)

    # PyTorch nn.Linear default init: U(-1/sqrt(in), 1/sqrt(in)).
    lim1 = 1.0 / jnp.sqrt(jnp.float32(H))
    lim2 = 1.0 / jnp.sqrt(jnp.float32(HIDDEN_DIM))
    w1 = jax.random.uniform(k_w1, (H, HIDDEN_DIM), jnp.float32,
                            -lim1, lim1).astype(jnp.bfloat16)
    b1 = jax.random.uniform(k_b1, (1, HIDDEN_DIM), jnp.float32, -lim1, lim1)
    w2 = jax.random.uniform(k_w2, (HIDDEN_DIM, NUM_CLASSES), jnp.float32,
                            -lim2, lim2).astype(jnp.bfloat16)
    b2 = jax.random.uniform(k_b2, (1, NUM_CLASSES), jnp.float32, -lim2, lim2)

    # One-time parameter prep (padding hoisted out of the per-call path).
    params = prepare_mlp_head_params(w1, b1, w2, b2)

    # Case 1: tiny batch (block == full batch dim).
    logits = jax.block_until_ready(mlp_classifier_head(last_hidden_state, params))
    ref = _reference(last_hidden_state, w1, b1, w2, b2)
    assert logits.shape == (B, NUM_CLASSES), logits.shape
    assert jnp.allclose(logits, ref, atol=2e-2, rtol=2e-2), "mismatch (tiny batch)"

    # Case 2: ragged batch (B not a multiple of the tile) — exercises the
    # boundary-masked last block that replaced the full-slab pad copy.
    B2 = 20
    lhs2 = jax.random.normal(k_x2, (B2, S, H), jnp.float32).astype(jnp.bfloat16)
    logits2 = jax.block_until_ready(mlp_classifier_head(lhs2, params))
    ref2 = _reference(lhs2, w1, b1, w2, b2)
    assert logits2.shape == (B2, NUM_CLASSES), logits2.shape
    assert jnp.allclose(logits2, ref2, atol=2e-2, rtol=2e-2), "mismatch (ragged batch)"

    print("KERNEL_OK")
</pallas_src>

<mosaic_0001>
module attributes {stable_mosaic.version = 11 : i64} {
  func.func @_mlp_head_kernel(%arg0: i32, %arg1: memref<2x128xbf16, #tpu.memory_space<vmem>>, %arg2: memref<128x128xbf16, #tpu.memory_space<vmem>>, %arg3: memref<1x128xf32, #tpu.memory_space<vmem>>, %arg4: memref<128x128xbf16, #tpu.memory_space<vmem>>, %arg5: memref<1x128xf32, #tpu.memory_space<vmem>>, %arg6: memref<2x128xf32, #tpu.memory_space<vmem>>) attributes {dimension_semantics = [#tpu.dimension_semantics<parallel>], iteration_bounds = array<i64: 1>, scalar_prefetch = 0 : i64, scratch_operands = 0 : i64, tpu.core_type = #tpu.core_type<tc>, window_params = [{transform_indices = @transform_0, window_bounds = array<i64: 2, 128>}, {pipeline_mode = #tpu.pipeline_mode<synchronous>, transform_indices = @transform_1, window_bounds = array<i64: 128, 128>}, {pipeline_mode = #tpu.pipeline_mode<synchronous>, transform_indices = @transform_2, window_bounds = array<i64: 1, 128>}, {pipeline_mode = #tpu.pipeline_mode<synchronous>, transform_indices = @transform_3, window_bounds = array<i64: 128, 128>}, {pipeline_mode = #tpu.pipeline_mode<synchronous>, transform_indices = @transform_4, window_bounds = array<i64: 1, 128>}, {transform_indices = @transform_5, window_bounds = array<i64: 2, 128>}]} {
    %c0 = arith.constant 0 : index
    %c0_0 = arith.constant 0 : index
    %0 = vector.load %arg1[%c0, %c0_0] : memref<2x128xbf16, #tpu.memory_space<vmem>>, vector<2x128xbf16>
    %c0_1 = arith.constant 0 : index
    %c0_2 = arith.constant 0 : index
    %1 = vector.load %arg2[%c0_1, %c0_2] : memref<128x128xbf16, #tpu.memory_space<vmem>>, vector<128x128xbf16>
    %cst = arith.constant dense<0.000000e+00> : vector<2x128xf32>
    %2 = tpu.matmul %0, %1, %cst {dimension_numbers = #tpu.dot_dimension_numbers<[1], [0], [0], [1], [0, 0, 1, 1], [], []>} : vector<2x128xbf16>, vector<128x128xbf16>, vector<2x128xf32> -> vector<2x128xf32>
    %c0_3 = arith.constant 0 : index
    %c0_4 = arith.constant 0 : index
    %3 = vector.load %arg3[%c0_3, %c0_4] : memref<1x128xf32, #tpu.memory_space<vmem>>, vector<1x128xf32>
    %4 = vector.broadcast %3 : vector<1x128xf32> to vector<2x128xf32>
    %5 = arith.addf %2, %4 : vector<2x128xf32>
    %cst_5 = arith.constant 0.000000e+00 : f32
    %6 = vector.broadcast %cst_5 : f32 to vector<2x128xf32>
    %7 = arith.maximumf %5, %6 : vector<2x128xf32>
    %8 = arith.truncf %7 : vector<2x128xf32> to vector<2x128xbf16>
    %c0_6 = arith.constant 0 : index
    %c0_7 = arith.constant 0 : index
    %9 = vector.load %arg4[%c0_6, %c0_7] : memref<128x128xbf16, #tpu.memory_space<vmem>>, vector<128x128xbf16>
    %cst_8 = arith.constant dense<0.000000e+00> : vector<2x128xf32>
    %10 = tpu.matmul %8, %9, %cst_8 {dimension_numbers = #tpu.dot_dimension_numbers<[1], [0], [0], [1], [0, 0, 1, 1], [], []>} : vector<2x128xbf16>, vector<128x128xbf16>, vector<2x128xf32> -> vector<2x128xf32>
    %c0_9 = arith.constant 0 : index
    %c0_10 = arith.constant 0 : index
    %11 = vector.load %arg5[%c0_9, %c0_10] : memref<1x128xf32, #tpu.memory_space<vmem>>, vector<1x128xf32>
    %12 = vector.broadcast %11 : vector<1x128xf32> to vector<2x128xf32>
    %13 = arith.addf %10, %12 : vector<2x128xf32>
    %c0_11 = arith.constant 0 : index
    %c0_12 = arith.constant 0 : index
    %14 = vector.load %arg6[%c0_11, %c0_12] : memref<2x128xf32, #tpu.memory_space<vmem>>, vector<2x128xf32>
    tpu.vector_store %arg6[%c0_11, %c0_12], %13 {strides = array<i32>} : memref<2x128xf32, #tpu.memory_space<vmem>>, vector<2x128xf32>,
    return
  }
  func.func @transform_0(%arg0: i32) -> (i32, i32) {
    %c0_i32 = arith.constant 0 : i32
    %c0_i32_0 = arith.constant 0 : i32
    return %arg0, %c0_i32 : i32, i32
  }
  func.func @transform_1(%arg0: i32) -> (i32, i32) {
    %c0_i32 = arith.constant 0 : i32
    %c0_i32_0 = arith.constant 0 : i32
    %c0_i32_1 = arith.constant 0 : i32
    return %c0_i32, %c0_i32_0 : i32, i32
  }
  func.func @transform_2(%arg0: i32) -> (i32, i32) {
    %c0_i32 = arith.constant 0 : i32
    %c0_i32_0 = arith.constant 0 : i32
    %c0_i32_1 = arith.constant 0 : i32
    return %c0_i32, %c0_i32_0 : i32, i32
  }
  func.func @transform_3(%arg0: i32) -> (i32, i32) {
    %c0_i32 = arith.constant 0 : i32
    %c0_i32_0 = arith.constant 0 : i32
    %c0_i32_1 = arith.constant 0 : i32
    return %c0_i32, %c0_i32_0 : i32, i32
  }
  func.func @transform_4(%arg0: i32) -> (i32, i32) {
    %c0_i32 = arith.constant 0 : i32
    %c0_i32_0 = arith.constant 0 : i32
    %c0_i32_1 = arith.constant 0 : i32
    return %c0_i32, %c0_i32_0 : i32, i32
  }
  func.func @transform_5(%arg0: i32) -> (i32, i32) {
    %c0_i32 = arith.constant 0 : i32
    %c0_i32_0 = arith.constant 0 : i32
    return %arg0, %c0_i32 : i32, i32
  }
}

</mosaic_0001>

<llo_original>
// kernel: tpu_custom_call.1
$region0: #{tpu_custom_call.1}
  #allocation0 [shape = 'u32[]', space=smem, size = 0x4, offset = 0x4, fixed_abs, tag = 'smem constant byte address 0x4 - core index']
  #allocation1 [shape = 'u32[72,128]{1,0:T(1,128)}', space=vmem, size = 0x9000, scoped, tag = 'internal scratch']
  %s0 = inlined_call_operand.hbm [shape: bf16[2,1024], index: 0, kind: input, shape index: {}]
  %s1 = inlined_call_operand.hbm [shape: bf16[128,128], index: 1, kind: input, shape index: {}]
  %s2 = inlined_call_operand.vmem [shape: f32[1,128], index: 2, kind: input, shape index: {}]
  %s3 = inlined_call_operand.hbm [shape: bf16[128,128], index: 3, kind: input, shape index: {}]
  %s4 = inlined_call_operand.vmem [shape: f32[1,128], index: 4, kind: input, shape index: {}]
  %s5 = inlined_call_operand.hbm [shape: f32[2,128], index: 5, kind: output, shape index: {}]
  %s6 = sld [smem:[#allocation0]]
  $region42: #{tpu_custom_call.1} parent=0
    _
  %s8 = ssub.s32 1, %s6
  %s9 = scalar_select 0, %s8, %s6
  $region1: #{tpu_custom_call.1} parent=0
    #allocation2 [shape = 'u8[512]{0}', space=vmem, size = 0x400, scoped, tag = 'input window, operand 0, single buffered']
    #allocation3 [shape = 's32[1]{0}', space=sflag, size = 0x4, scoped, tag = 'scoped memory for tpu_custom_call.1']
    #allocation4 [shape = 's32[1]{0}', space=sflag, size = 0x4, scoped, tag = 'scoped memory for tpu_custom_call.1']
    #allocation5 [shape = 'u8[32768]{0}', space=vmem, size = 0x8000, scoped, tag = 'input window, operand 1, single buffered']
    #allocation6 [shape = 's32[1]{0}', space=sflag, size = 0x4, scoped, tag = 'scoped memory for tpu_custom_call.1']
    #allocation7 [shape = 'u8[32768]{0}', space=vmem, size = 0x8000, scoped, tag = 'input window, operand 3, single buffered']
    #allocation8 [shape = 'u8[1024]{0}', space=vmem, size = 0x400, scoped, tag = 'output window, operand 0, single buffered']
    %10 = vsyncpa [#allocation3], 0
    %11 = vsyncpa [#allocation6], 0
    %12 = vsyncpa [#allocation4], 0
    // Predicated region
    $region2: #{tpu_custom_call.1} parent=1 // pred_check
      _
    $region3: #{tpu_custom_call.1} parent=1 // pred_check_branch
      %14 = sbr.rel (0) target = $region5
    $region4: #{tpu_custom_call.1} parent=1 // pred_region
      %16 = vsyncadd [#allocation3], 0
      %s18 = sshll.u32 %s0, 4
      %s19 = int_to_ptr.hbm [resolvable:$true] %s18
      %s20 = sshll.u32 [#allocation2], 4
      %s21 = int_to_ptr.vmem [resolvable:$true] %s20
      %23 = dma.hbm_to_vmem [thread:$0]  %s19, 16, %s21, [#allocation3]
    $region5: #{tpu_custom_call.1} parent=1 // pred_fallthru
      _
    // Predicated region
    $region6: #{tpu_custom_call.1} parent=1 // pred_check
      _
    $region7: #{tpu_custom_call.1} parent=1 // pred_check_branch
      %25 = sbr.rel (0) target = $region9
    $region8: #{tpu_custom_call.1} parent=1 // pred_region
      %27 = vsyncadd [#allocation6], 0
      %s28 = sshll.u32 %s1, 4
      %s29 = int_to_ptr.hbm [resolvable:$true] %s28
      %s30 = sshll.u32 [#allocation5], 4
      %s31 = int_to_ptr.vmem [resolvable:$true] %s30
      %36 = dma.hbm_to_vmem [thread:$0]  %s29, 1024, %s31, [#allocation6], 64, 64, 4
    $region9: #{tpu_custom_call.1} parent=1 // pred_fallthru
      _
    // Predicated region
    $region10: #{tpu_custom_call.1} parent=1 // pred_check
      _
    $region11: #{tpu_custom_call.1} parent=1 // pred_check_branch
      %38 = sbr.rel (0) target = $region13
    $region12: #{tpu_custom_call.1} parent=1 // pred_region
      _
    $region13: #{tpu_custom_call.1} parent=1 // pred_fallthru
      _
    // Predicated region
    $region14: #{tpu_custom_call.1} parent=1 // pred_check
      _
    $region15: #{tpu_custom_call.1} parent=1 // pred_check_branch
      %40 = sbr.rel (0) target = $region17
    $region16: #{tpu_custom_call.1} parent=1 // pred_region
      %42 = vsyncadd [#allocation6], 0
      %s43 = sshll.u32 %s3, 4
      %s44 = int_to_ptr.hbm [resolvable:$true] %s43
      %s45 = sshll.u32 [#allocation7], 4
      %s46 = int_to_ptr.vmem [resolvable:$true] %s45
      %51 = dma.hbm_to_vmem [thread:$0]  %s44, 1024, %s46, [#allocation6], 64, 64, 4
    $region17: #{tpu_custom_call.1} parent=1 // pred_fallthru
      _
    // Predicated region
    $region18: #{tpu_custom_call.1} parent=1 // pred_check
      _
    $region19: #{tpu_custom_call.1} parent=1 // pred_check_branch
      %53 = sbr.rel (0) target = $region21
    $region20: #{tpu_custom_call.1} parent=1 // pred_region
      _
    $region21: #{tpu_custom_call.1} parent=1 // pred_fallthru
      _
    // Predicated region
    $region22: #{tpu_custom_call.1} parent=1 // pred_check
      _
    $region23: #{tpu_custom_call.1} parent=1 // pred_check_branch
      %55 = sbr.rel (0) target = $region25
    $region24: #{tpu_custom_call.1} parent=1 // pred_region
      %57 = dma.done [#allocation3], 16
    $region25: #{tpu_custom_call.1} parent=1 // pred_fallthru
      _
    // Predicated region
    $region26: #{tpu_custom_call.1} parent=1 // pred_check
      _
    $region27: #{tpu_custom_call.1} parent=1 // pred_check_branch
      %59 = sbr.rel (0) target = $region29
    $region28: #{tpu_custom_call.1} parent=1 // pred_region
      %61 = dma.done [#allocation6], 1024
    $region29: #{tpu_custom_call.1} parent=1 // pred_fallthru
      _
    // Predicated region
    $region30: #{tpu_custom_call.1} parent=1 // pred_check
      _
    $region31: #{tpu_custom_call.1} parent=1 // pred_check_branch
      %63 = sbr.rel (0) target = $region33
    $region32: #{tpu_custom_call.1} parent=1 // pred_region
      %65 = dma.done [#allocation6], 1024
    $region33: #{tpu_custom_call.1} parent=1 // pred_fallthru
      _
    %v66 = vld [vmem:[#allocation2] sm:$0x1]
    %v67 = vld [vmem:[#allocation5] sm:$0xf]
    %v68 = vld [vmem:[#allocation5 + $0x4] sm:$0xf]
    %v69 = vld [vmem:[#allocation5 + $0x8] sm:$0xf]
    %v70 = vld [vmem:[#allocation5 + $0xc] sm:$0xf]
    %v71 = vld [vmem:[#allocation5 + $0x10] sm:$0xf]
    %v72 = vld [vmem:[#allocation5 + $0x14] sm:$0xf]
    %v73 = vld [vmem:[#allocation5 + $0x18] sm:$0xf]
    %v74 = vld [vmem:[#allocation5 + $0x1c] sm:$0xf]
    %v75 = vld [vmem:[#allocation5 + $0x20] sm:$0xf]
    %v76 = vld [vmem:[#allocation5 + $0x24] sm:$0xf]
    %v77 = vld [vmem:[#allocation5 + $0x28] sm:$0xf]
    %v78 = vld [vmem:[#allocation5 + $0x2c] sm:$0xf]
    %v79 = vld [vmem:[#allocation5 + $0x30] sm:$0xf]
    %v80 = vld [vmem:[#allocation5 + $0x34] sm:$0xf]
    %v81 = vld [vmem:[#allocation5 + $0x38] sm:$0xf]
    %v82 = vld [vmem:[#allocation5 + $0x3c] sm:$0xf]
    %v83 = vld [vmem:[%s2] sm:$0x1]
    %v85 = vperm.slane %v83, 0
    %v103 = vunpack.c.l.b16 %v67
    %v104 = vunpack.c.l.b16 %v68
    %v105 = vunpack.c.l.b16 %v69
    %v106 = vunpack.c.l.b16 %v70
    %v107 = vunpack.c.l.b16 %v71
    %v108 = vunpack.c.l.b16 %v72
    %v109 = vunpack.c.l.b16 %v73
    %v110 = vunpack.c.l.b16 %v74
    %v111 = vunpack.c.l.b16 %v75
    %v112 = vunpack.c.l.b16 %v76
    %v113 = vunpack.c.l.b16 %v77
    %v114 = vunpack.c.l.b16 %v78
    %v115 = vunpack.c.l.b16 %v79
    %v116 = vunpack.c.l.b16 %v80
    %v117 = vunpack.c.l.b16 %v81
    %v118 = vunpack.c.l.b16 %v82
    %v119 = vpack.c.b16 %v104, %v103
    %v120 = vpack.c.b16 %v106, %v105
    %v121 = vpack.c.b16 %v108, %v107
    %v122 = vpack.c.b16 %v110, %v109
    %v123 = vpack.c.b16 %v112, %v111
    %v124 = vpack.c.b16 %v114, %v113
    %v125 = vpack.c.b16 %v116, %v115
    %v126 = vpack.c.b16 %v118, %v117
    %135 = vmatpush.bf16.msra.mxu0 %v126
    %136 = vmatpush.bf16.msra.mxu0 %v125
    %137 = vmatpush.bf16.msra.mxu0 %v124
    %138 = vmatpush.bf16.msra.mxu0 %v123
    %139 = vmatpush.bf16.msra.mxu0 %v122
    %140 = vmatpush.bf16.msra.mxu0 %v121
    %141 = vmatpush.bf16.msra.mxu0 %v120
    %142 = vmatpush.bf16.msra.mxu0 %v119
    %143 = vmatmul.bf16.gmra.mxu0 %v66
    %v144 = vpop.f32.mrf.mxu0
    %v145 = vadd.f32 %v85, %v144
    %v146 = vpop.f32.mrf.mxu0
    %147 = vdwg.mxu0
    %v148 = vmax.f32 %v145, 0.0
    %v149 = vpack.c.bf16 %v148, %v148
    %v150 = vld [vmem:[#allocation7] sm:$0xf]
    %v151 = vld [vmem:[#allocation7 + $0x4] sm:$0xf]
    %v152 = vld [vmem:[#allocation7 + $0x8] sm:$0xf]
    %v153 = vld [vmem:[#allocation7 + $0xc] sm:$0xf]
    %v154 = vld [vmem:[#allocation7 + $0x10] sm:$0xf]
    %v155 = vld [vmem:[#allocation7 + $0x14] sm:$0xf]
    %v156 = vld [vmem:[#allocation7 + $0x18] sm:$0xf]
    %v157 = vld [vmem:[#allocation7 + $0x1c] sm:$0xf]
    %v158 = vld [vmem:[#allocation7 + $0x20] sm:$0xf]
    %v159 = vld [vmem:[#allocation7 + $0x24] sm:$0xf]
    %v160 = vld [vmem:[#allocation7 + $0x28] sm:$0xf]
    %v161 = vld [vmem:[#allocation7 + $0x2c] sm:$0xf]
    %v162 = vld [vmem:[#allocation7 + $0x30] sm:$0xf]
    %v163 = vld [vmem:[#allocation7 + $0x34] sm:$0xf]
    %v164 = vld [vmem:[#allocation7 + $0x38] sm:$0xf]
    %v165 = vld [vmem:[#allocation7 + $0x3c] sm:$0xf]
    %v166 = vld [vmem:[%s4] sm:$0x1]
    %v168 = vperm.slane %v166, 0
    %v186 = vunpack.c.l.b16 %v150
    %v187 = vunpack.c.l.b16 %v151
    %v188 = vunpack.c.l.b16 %v152
    %v189 = vunpack.c.l.b16 %v153
    %v190 = vunpack.c.l.b16 %v154
    %v191 = vunpack.c.l.b16 %v155
    %v192 = vunpack.c.l.b16 %v156
    %v193 = vunpack.c.l.b16 %v157
    %v194 = vunpack.c.l.b16 %v158
    %v195 = vunpack.c.l.b16 %v159
    %v196 = vunpack.c.l.b16 %v160
    %v197 = vunpack.c.l.b16 %v161
    %v198 = vunpack.c.l.b16 %v162
    %v199 = vunpack.c.l.b16 %v163
    %v200 = vunpack.c.l.b16 %v164
    %v201 = vunpack.c.l.b16 %v165
    %v202 = vpack.c.b16 %v187, %v186
    %v203 = vpack.c.b16 %v189, %v188
    %v204 = vpack.c.b16 %v191, %v190
    %v205 = vpack.c.b16 %v193, %v192
    %v206 = vpack.c.b16 %v195, %v194
    %v207 = vpack.c.b16 %v197, %v196
    %v208 = vpack.c.b16 %v199, %v198
    %v209 = vpack.c.b16 %v201, %v200
    %218 = vmatpush.bf16.msra.mxu0 %v209
    %219 = vmatpush.bf16.msra.mxu0 %v208
    %220 = vmatpush.bf16.msra.mxu0 %v207
    %221 = vmatpush.bf16.msra.mxu0 %v206
    %222 = vmatpush.bf16.msra.mxu0 %v205
    %223 = vmatpush.bf16.msra.mxu0 %v204
    %224 = vmatpush.bf16.msra.mxu0 %v203
    %225 = vmatpush.bf16.msra.mxu0 %v202
    %226 = vmatmul.bf16.gmra.mxu0 %v149
    %v227 = vpop.f32.mrf.mxu0
    %v228 = vadd.f32 %v168, %v227
    %v229 = vpop.f32.mrf.mxu0
    %230 = vdwg.mxu0
    %231 = vst [vmem:[#allocation8] sm:$0x3] %v228
    // Predicated region
    $region34: #{tpu_custom_call.1} parent=1 // pred_check
      _
    $region35: #{tpu_custom_call.1} parent=1 // pred_check_branch
      %233 = sbr.rel (0) target = $region37
    $region36: #{tpu_custom_call.1} parent=1 // pred_region
      %235 = vsyncadd [#allocation4], 0
      %s237 = sshll.u32 [#allocation8], 4
      %s238 = int_to_ptr.vmem [resolvable:$true] %s237
      %s239 = sshll.u32 %s5, 4
      %s240 = int_to_ptr.hbm [resolvable:$true] %s239
      %242 = dma.vmem_to_hbm [thread:$0]  %s238, 32, %s240, [#allocation4]
    $region37: #{tpu_custom_call.1} parent=1 // pred_fallthru
      _
    // Predicated region
    $region38: #{tpu_custom_call.1} parent=1 // pred_check
      _
    $region39: #{tpu_custom_call.1} parent=1 // pred_check_branch
      %244 = sbr.rel (0) target = $region41
    $region40: #{tpu_custom_call.1} parent=1 // pred_region
      %246 = dma.done [#allocation4], 32
    $region41: #{tpu_custom_call.1} parent=1 // pred_fallthru
      _
    %247 = vsyncpa [#allocation3], 1
    %248 = vsyncpa [#allocation6], 1
    %249 = vsyncpa [#allocation4], 1

</llo_original>
